<compile_context>
chip_gen: v6e
topology: v6e:2x2x1
jax: 0.10.0
libtpu: 0.0.40
codegen_flags: <defaults>
</compile_context>

<pallas_src>
import jax
import jax.numpy as jnp
from jax.experimental import pallas as pl
from jax.experimental.pallas import tpu as pltpu


def encoder_block_kernel(x_ref, v_ref, gb_ref, o_ref):
    """Fused weight-norm conv (as matmul) + bias + ReLU, lane-dense in M.

    x_ref:  (K, MT)   im2col patches for one batch / one M tile, K = C_in*kh*kw
    v_ref:  (O, K)    weight_norm direction parameter v.reshape(O, K)
    gb_ref: (O, 2)    column 0 = weight_norm magnitude g, column 1 = conv bias
    o_ref:  (O, MT)   ReLU(conv(x)) output tile
    """
    v = v_ref[...]
    g = gb_ref[:, 0:1]                                    # (O, 1)
    b = gb_ref[:, 1:2]                                    # (O, 1)

    # weight_norm (dim=0): W[o, :] = g[o] * v[o, :] / ||v[o, :]||_2
    # Recomputed every grid step on purpose: it is O(K*O) VPU/XLU work vs
    # O(K*O*MT) MXU work (negligible), and gating it on program_id()==0 would
    # break under megacore 'parallel' sharding (a core that never visits tile 0
    # would read uninitialized scratch).
    sumsq = jnp.sum(v * v, axis=1, keepdims=True)         # (O, 1)
    w = v * (g * jax.lax.rsqrt(sumsq))                    # (O, K), EUP rsqrt

    # Conv as a lane-dense matmul on the MXU, f32 accumulate.
    acc = jnp.dot(w, x_ref[...], preferred_element_type=jnp.float32)   # (O, MT)
    o_ref[...] = jnp.maximum(acc + b, 0.0).astype(o_ref.dtype)         # bias + ReLU


def _pick_m_tile(m_sp, k, o):
    """Lane-axis tile: a multiple of 128 dividing m_sp, VMEM-budgeted.

    Double-buffered (patches + output) blocks are kept under ~8 MiB per grid
    step: 2 * (K + O) * m_tile * 4 bytes, well inside v7x's 64 MiB VMEM.
    """
    if m_sp % 128 != 0:
        return m_sp                         # small / ragged case: single tile
    for cand in (2048, 1024, 512, 256, 128):
        if m_sp % cand == 0 and 2 * (k + o) * cand * 4 <= 8 * 1024 * 1024:
            return cand
    return 128


def encoder_block_forward(x, v, g, bias, *, stride, padding):
    """Forward pass of encoder_block.

    x:    (B, C_in, H, W) f32
    v:    (C_hid, C_in, kh, kw) f32  -- weight_norm direction parameter
    g:    (C_hid,) f32               -- weight_norm magnitude parameter
    bias: (C_hid,) f32
    returns (B, C_hid, H_out, W_out) f32
    """
    B, C, H, W = x.shape
    O, _, kh, kw = v.shape
    K = C * kh * kw

    h_out = (H + 2 * padding - kh) // stride + 1
    w_out = (W + 2 * padding - kw) // stride + 1
    m_sp = h_out * w_out

    # im2col -> (B, K, Ho*Wo). Feature axis is ordered (c, ki, kj), matching
    # v.reshape(O, K); the trailing reshape is a free contiguous merge, so the
    # patches already arrive in the lane-dense (K, M) layout the kernel wants.
    # TODO(synk): pull patch extraction fully into the kernel (space-to-depth
    # slices of x held in VMEM) to remove the kh*kw/stride^2 HBM amplification
    # of this patches tensor at production PhyCRNet resolutions.
    patches = jax.lax.conv_general_dilated_patches(
        x.astype(jnp.float32), (kh, kw), (stride, stride),
        [(padding, padding), (padding, padding)],
        dimension_numbers=("NCHW", "OIHW", "NCHW"))        # (B, K, Ho, Wo)
    patches = patches.reshape(B, K, m_sp)                  # (B, K, M)

    v_mat = v.reshape(O, K).astype(jnp.float32)            # (O, K), free reshape
    gb = jnp.stack([g.astype(jnp.float32),
                    bias.astype(jnp.float32)], axis=1)     # (O, 2)

    m_tile = _pick_m_tile(m_sp, K, O)
    grid = (B, m_sp // m_tile)

    out = pl.pallas_call(
        encoder_block_kernel,
        out_shape=jax.ShapeDtypeStruct((B, O, m_sp), jnp.float32),
        grid=grid,
        in_specs=[
            # patches: batch dim squeezed, K whole, M tiled on the lane axis.
            pl.BlockSpec((None, K, m_tile), lambda b, m: (b, 0, m)),
            # parameters: full tiny blocks, constant index -> fetched once.
            pl.BlockSpec((O, K), lambda b, m: (0, 0)),
            pl.BlockSpec((O, 2), lambda b, m: (0, 0)),
        ],
        out_specs=pl.BlockSpec((None, O, m_tile), lambda b, m: (b, 0, m)),
        compiler_params=pltpu.CompilerParams(
            dimension_semantics=("parallel", "parallel"),
            vmem_limit_bytes=32 * 1024 * 1024),
    )(patches, v_mat, gb)

    # (B, O, Ho*Wo) rows are already NCHW-ordered -> free reshape, no transpose.
    return out.reshape(B, O, h_out, w_out)


def reference_forward(x, v, g, bias, *, stride, padding):
    """Plain-JAX reference of the PyTorch module forward."""
    n = jnp.sqrt(jnp.sum(v * v, axis=(1, 2, 3), keepdims=True))
    w = (g.reshape(-1, 1, 1, 1) / n) * v
    y = jax.lax.conv_general_dilated(
        x, w, window_strides=(stride, stride),
        padding=[(padding, padding), (padding, padding)],
        dimension_numbers=("NCHW", "OIHW", "NCHW"),
        precision=jax.lax.Precision.HIGHEST)
    return jnp.maximum(y + bias.reshape(1, -1, 1, 1), 0.0)


if __name__ == "__main__":
    # PhyCRNet Burgers first encoder block: input_channels=2, hidden_channels=32,
    # kernel=4, stride=2, padding=1 (small spatial size for the demo).
    B, C_in, H, W = 2, 2, 16, 16
    hidden, ksize, stride, pad = 32, 4, 2, 1

    key = jax.random.PRNGKey(0)
    k1, k2, k3, k4 = jax.random.split(key, 4)
    x = jax.random.normal(k1, (B, C_in, H, W), dtype=jnp.float32)
    v = jax.random.normal(k2, (hidden, C_in, ksize, ksize), dtype=jnp.float32) * 0.1

    # Case 1: faithful PyTorch initialization (weight_norm init: g = ||v||, bias = 0).
    g_init = jnp.sqrt(jnp.sum(v * v, axis=(1, 2, 3)))
    b_init = jnp.zeros((hidden,), dtype=jnp.float32)
    # Case 2: arbitrary parameters to exercise the weight-norm scale and bias paths.
    g_rand = jax.random.uniform(k3, (hidden,), dtype=jnp.float32, minval=0.5, maxval=1.5)
    b_rand = jax.random.normal(k4, (hidden,), dtype=jnp.float32) * 0.1

    for g, b in ((g_init, b_init), (g_rand, b_rand)):
        out = encoder_block_forward(x, v, g, b, stride=stride, padding=pad)
        out = jax.block_until_ready(out)
        ref = reference_forward(x, v, g, b, stride=stride, padding=pad)
        assert out.shape == ref.shape, (out.shape, ref.shape)
        assert jnp.allclose(out, ref, rtol=2e-3, atol=2e-3), (
            float(jnp.max(jnp.abs(out - ref))))

    print("KERNEL_OK")
</pallas_src>

<mosaic_0001>
module attributes {stable_mosaic.version = 11 : i64} {
  func.func @encoder_block_kernel(%arg0: i32, %arg1: i32, %arg2: memref<1x32x64xf32, #tpu.memory_space<vmem>>, %arg3: memref<32x32xf32, #tpu.memory_space<vmem>>, %arg4: memref<32x2xf32, #tpu.memory_space<vmem>>, %arg5: memref<1x32x64xf32, #tpu.memory_space<vmem>>) attributes {dimension_semantics = [#tpu.dimension_semantics<parallel>, #tpu.dimension_semantics<parallel>], iteration_bounds = array<i64: 2, 1>, scalar_prefetch = 0 : i64, scratch_operands = 0 : i64, tpu.core_type = #tpu.core_type<tc>, window_params = [{transform_indices = @transform_0, window_bounds = array<i64: 1, 32, 64>}, {pipeline_mode = #tpu.pipeline_mode<synchronous>, transform_indices = @transform_1, window_bounds = array<i64: 32, 32>}, {pipeline_mode = #tpu.pipeline_mode<synchronous>, transform_indices = @transform_2, window_bounds = array<i64: 32, 2>}, {transform_indices = @transform_3, window_bounds = array<i64: 1, 32, 64>}]} {
    %c0 = arith.constant 0 : index
    %c0_0 = arith.constant 0 : index
    %0 = vector.load %arg3[%c0, %c0_0] : memref<32x32xf32, #tpu.memory_space<vmem>>, vector<32x32xf32>
    %c0_1 = arith.constant 0 : index
    %c0_2 = arith.constant 0 : index
    %1 = vector.load %arg4[%c0_1, %c0_2] : memref<32x2xf32, #tpu.memory_space<vmem>>, vector<32x1xf32>
    %c0_3 = arith.constant 0 : index
    %c1 = arith.constant 1 : index
    %2 = vector.load %arg4[%c0_3, %c1] : memref<32x2xf32, #tpu.memory_space<vmem>>, vector<32x1xf32>
    %3 = arith.mulf %0, %0 : vector<32x32xf32>
    %cst = arith.constant dense<0.000000e+00> : vector<32xf32>
    %4 = vector.multi_reduction <add>, %3, %cst [1] : vector<32x32xf32> to vector<32xf32>
    %5 = vector.shape_cast %4 : vector<32xf32> to vector<32x1xf32>
    %6 = math.rsqrt %5 : vector<32x1xf32>
    %7 = arith.mulf %1, %6 : vector<32x1xf32>
    %8 = vector.broadcast %7 : vector<32x1xf32> to vector<32x32xf32>
    %9 = arith.mulf %0, %8 : vector<32x32xf32>
    %c0_4 = arith.constant 0 : index
    %c0_5 = arith.constant 0 : index
    %c0_6 = arith.constant 0 : index
    %10 = vector.load %arg2[%c0_4, %c0_5, %c0_6] : memref<1x32x64xf32, #tpu.memory_space<vmem>>, vector<1x32x64xf32>
    %11 = vector.shape_cast %10 : vector<1x32x64xf32> to vector<32x64xf32>
    %cst_7 = arith.constant dense<0.000000e+00> : vector<32x64xf32>
    %12 = tpu.matmul %9, %11, %cst_7 {dimension_numbers = #tpu.dot_dimension_numbers<[1], [0], [0], [1], [0, 0, 1, 1], [], []>} : vector<32x32xf32>, vector<32x64xf32>, vector<32x64xf32> -> vector<32x64xf32>
    %13 = vector.broadcast %2 : vector<32x1xf32> to vector<32x64xf32>
    %14 = arith.addf %12, %13 : vector<32x64xf32>
    %cst_8 = arith.constant 0.000000e+00 : f32
    %15 = vector.broadcast %cst_8 : f32 to vector<32x64xf32>
    %16 = arith.maximumf %14, %15 : vector<32x64xf32>
    %c0_9 = arith.constant 0 : index
    %c0_10 = arith.constant 0 : index
    %c0_11 = arith.constant 0 : index
    %17 = vector.load %arg5[%c0_9, %c0_10, %c0_11] : memref<1x32x64xf32, #tpu.memory_space<vmem>>, vector<1x32x64xf32>
    %18 = vector.shape_cast %17 : vector<1x32x64xf32> to vector<32x64xf32>
    %19 = vector.shape_cast %16 : vector<32x64xf32> to vector<1x32x64xf32>
    tpu.vector_store %arg5[%c0_9, %c0_10, %c0_11], %19 {strides = array<i32>} : memref<1x32x64xf32, #tpu.memory_space<vmem>>, vector<1x32x64xf32>,
    return
  }
  func.func @transform_0(%arg0: i32, %arg1: i32) -> (i32, i32, i32) {
    %c0_i32 = arith.constant 0 : i32
    %c0_i32_0 = arith.constant 0 : i32
    return %arg0, %c0_i32, %arg1 : i32, i32, i32
  }
  func.func @transform_1(%arg0: i32, %arg1: i32) -> (i32, i32) {
    %c0_i32 = arith.constant 0 : i32
    %c0_i32_0 = arith.constant 0 : i32
    %c0_i32_1 = arith.constant 0 : i32
    return %c0_i32, %c0_i32_0 : i32, i32
  }
  func.func @transform_2(%arg0: i32, %arg1: i32) -> (i32, i32) {
    %c0_i32 = arith.constant 0 : i32
    %c0_i32_0 = arith.constant 0 : i32
    %c0_i32_1 = arith.constant 0 : i32
    return %c0_i32, %c0_i32_0 : i32, i32
  }
  func.func @transform_3(%arg0: i32, %arg1: i32) -> (i32, i32, i32) {
    %c0_i32 = arith.constant 0 : i32
    %c0_i32_0 = arith.constant 0 : i32
    return %arg0, %c0_i32, %arg1 : i32, i32, i32
  }
}

</mosaic_0001>

<llo_original>
// kernel: tpu_custom_call.1
$region0: #{tpu_custom_call.1}
  #allocation0 [shape = 'u32[]', space=smem, size = 0x4, offset = 0x4, fixed_abs, tag = 'smem constant byte address 0x4 - core index']
  #allocation1 [shape = 'u32[144,128]{1,0:T(1,128)}', space=vmem, size = 0x12000, scoped, tag = 'internal scratch']
  %s0 = inlined_call_operand.hbm [shape: f32[2,32,64], index: 0, kind: input, shape index: {}]
  %s1 = inlined_call_operand.vmem [shape: f32[32,32], index: 1, kind: input, shape index: {}]
  %s2 = inlined_call_operand.vmem [shape: f32[32,2], index: 2, kind: input, shape index: {}]
  %s3 = inlined_call_operand.hbm [shape: f32[2,32,64], index: 3, kind: output, shape index: {}]
  %s4 = sld [smem:[#allocation0]]
  $region49: #{tpu_custom_call.1} parent=0
    _
  %s6 = ssub.s32 1, %s4
  %s7 = scalar_select 0, %s6, %s4
  $region1: #{tpu_custom_call.1} parent=0
    #allocation2 [shape = 'u8[32768]{0}', space=vmem, size = 0x8000, scoped, tag = 'input window, operand 0']
    #allocation3 [shape = 's32[2]{0}', space=sflag, size = 0x8, scoped, tag = 'scoped memory for tpu_custom_call.1']
    #allocation4 [shape = 's32[2]{0}', space=sflag, size = 0x8, scoped, tag = 'scoped memory for tpu_custom_call.1']
    #allocation5 [shape = 'u8[32768]{0}', space=vmem, size = 0x8000, scoped, tag = 'output window, operand 0']
    %8 = vsyncpa [#allocation3], 0
    %s9 = scalar_lea.sflag [#allocation3], 1
    %10 = vsyncpa %s9, 0
    %11 = vsyncpa [#allocation4], 0
    %s12 = scalar_lea.sflag [#allocation4], 1
    %13 = vsyncpa %s12, 0
    loop: start=0, step=1, limit=4
    $region2: #{tpu_custom_call.1} parent=1 // loop_pre_header
      _
    $region3: #{tpu_custom_call.1} parent=1 // loop_header
      %s15 = sphi 0, %s19
      %p16 = scmp.ge.s32.totalorder %s15, 4
      %s22 = sphi 0, %s34
      %s23 = sphi 0, %s30
      %s24 = sphi 0, %s22
      %s25 = sphi 0, %s23
      %s26 = sphi 0, %s24
      %s27 = sphi 0, %s25
      %s39 = sphi 0, %s41
      %s42 = sphi 0, %s39
      %s43 = sphi 0, %s42
      %s59 = sphi 0, %s43
      %s63 = sphi 0, %s63
      %s65 = sphi 0, %s63
      %s66 = sphi 0, %s65
      %s80 = sphi 0, %s66
      %s84 = sphi 0, %s84
      %s86 = sphi 0, %s84
      %s87 = sphi 0, %s86
      %s101 = sphi 0, %s87
      %s109 = sphi 0, %s111
      %s112 = sphi 0, %s109
      %s113 = sphi 0, %s112
      %s129 = sphi 0, %s113
    $region4: #{tpu_custom_call.1} parent=1 // loop_header_branch
      %18 = sbr.rel (%p16) target = $region8
    $region5: #{tpu_custom_call.1} parent=1 // loop_body
      %s20 = ssub.s32 %s15, 1
      %s21 = ssub.s32 %s15, 2
      %s28 = sadd.s32 1, %s23
      %p29 = scmp.ge.s32.totalorder %s28, 1
      %s30 = scalar_select %p29, 0, %s28
      %s31 = sadd.s32 1, %s22
      %s32 = scalar_select %p29, %s31, %s22
      %p33 = scmp.ge.s32.totalorder %s32, 2
      %s34 = scalar_select %p33, 0, %s32
      %s35 = ssub.s32 %s22, %s34
      %s36 = ssub.s32 %s23, %s30
      %s37 = sor.u32 %s35, %s36
      %p38 = scmp.eq.s32.totalorder %s37, 0
      %s40 = sadd.s32 %s39, 1
      %s41 = scalar_select %p38, %s39, %s40
      %p44 = pneg %p38
      %p45 = scmp.eq.s32.totalorder %s15, 1
      %p46 = por %p44, %p45
      %p47 = scmp.ne.s32.totalorder %s39, %s42
      %p48 = scmp.eq.s32.totalorder %s15, 0
      %p49 = por %p47, %p48
      %p50 = scmp.ne.s32.totalorder %s39, %s42
      %p51 = scmp.eq.s32.totalorder %s20, 1
      %p52 = por %p50, %p51
      %p53 = scmp.ne.s32.totalorder %s42, %s43
      %p54 = scmp.eq.s32.totalorder %s20, 0
      %p55 = por %p53, %p54
      %p56 = scmp.ne.s32.totalorder %s42, %s43
      %p57 = scmp.eq.s32.totalorder %s21, 1
      %p58 = por %p56, %p57
      %p60 = scmp.ne.s32.totalorder %s43, %s59
      %p61 = scmp.eq.s32.totalorder %s21, 0
      %p62 = por %p60, %p61
      %s64 = sadd.s32 %s63, 1
      %p67 = scmp.eq.s32.totalorder %s15, 1
      %p68 = scmp.ne.s32.totalorder %s63, %s65
      %p69 = scmp.eq.s32.totalorder %s15, 0
      %p70 = por %p68, %p69
      %p71 = scmp.ne.s32.totalorder %s63, %s65
      %p72 = scmp.eq.s32.totalorder %s20, 1
      %p73 = por %p71, %p72
      %p74 = scmp.ne.s32.totalorder %s65, %s66
      %p75 = scmp.eq.s32.totalorder %s20, 0
      %p76 = por %p74, %p75
      %p77 = scmp.ne.s32.totalorder %s65, %s66
      %p78 = scmp.eq.s32.totalorder %s21, 1
      %p79 = por %p77, %p78
      %p81 = scmp.ne.s32.totalorder %s66, %s80
      %p82 = scmp.eq.s32.totalorder %s21, 0
      %p83 = por %p81, %p82
      %s85 = sadd.s32 %s84, 1
      %p88 = scmp.eq.s32.totalorder %s15, 1
      %p89 = scmp.ne.s32.totalorder %s84, %s86
      %p90 = scmp.eq.s32.totalorder %s15, 0
      %p91 = por %p89, %p90
      %p92 = scmp.ne.s32.totalorder %s84, %s86
      %p93 = scmp.eq.s32.totalorder %s20, 1
      %p94 = por %p92, %p93
      %p95 = scmp.ne.s32.totalorder %s86, %s87
      %p96 = scmp.eq.s32.totalorder %s20, 0
      %p97 = por %p95, %p96
      %p98 = scmp.ne.s32.totalorder %s86, %s87
      %p99 = scmp.eq.s32.totalorder %s21, 1
      %p100 = por %p98, %p99
      %p102 = scmp.ne.s32.totalorder %s87, %s101
      %p103 = scmp.eq.s32.totalorder %s21, 0
      %p104 = por %p102, %p103
      %s105 = ssub.s32 %s22, %s34
      %s106 = ssub.s32 %s23, %s30
      %s107 = sor.u32 %s105, %s106
      %p108 = scmp.eq.s32.totalorder %s107, 0
      %s110 = sadd.s32 %s109, 1
      %s111 = scalar_select %p108, %s109, %s110
      %p114 = pneg %p108
      %p115 = scmp.eq.s32.totalorder %s15, 1
      %p116 = por %p114, %p115
      %p117 = scmp.ne.s32.totalorder %s109, %s112
      %p118 = scmp.eq.s32.totalorder %s15, 0
      %p119 = por %p117, %p118
      %p120 = scmp.ne.s32.totalorder %s109, %s112
      %p121 = scmp.eq.s32.totalorder %s20, 1
      %p122 = por %p120, %p121
      %p123 = scmp.ne.s32.totalorder %s112, %s113
      %p124 = scmp.eq.s32.totalorder %s20, 0
      %p125 = por %p123, %p124
      %p126 = scmp.ne.s32.totalorder %s112, %s113
      %p127 = scmp.eq.s32.totalorder %s21, 1
      %p128 = por %p126, %p127
      %p130 = scmp.ne.s32.totalorder %s113, %s129
      %p131 = scmp.eq.s32.totalorder %s21, 0
      %p132 = por %p130, %p131
      %p133 = scmp.le.s32.totalorder 1, %s15
      %p134 = scmp.lt.s32.totalorder %s15, 3
      %p135 = pnand %p133, %p134
      %p136 = pneg %p135
      // Predicated region
      $region9: #{tpu_custom_call.1} parent=5 // pred_check
        _
      $region10: #{tpu_custom_call.1} parent=5 // pred_check_branch
        %138 = sbr.rel (%p135) target = $region12
      $region11: #{tpu_custom_call.1} parent=5 // pred_region
        %s139 = ssub.s32 %s15, 1
        // Predicated region
        $region13: #{tpu_custom_call.1} parent=11 // pred_check
          %p140 = pneg %p76
        $region14: #{tpu_custom_call.1} parent=11 // pred_check_branch
          %142 = sbr.rel (%p140) target = $region16
        $region15: #{tpu_custom_call.1} parent=11 // pred_region
          _
        $region16: #{tpu_custom_call.1} parent=11 // pred_fallthru
          _
        // Predicated region
        $region17: #{tpu_custom_call.1} parent=11 // pred_check
          %p143 = pneg %p97
        $region18: #{tpu_custom_call.1} parent=11 // pred_check_branch
          %145 = sbr.rel (%p143) target = $region20
        $region19: #{tpu_custom_call.1} parent=11 // pred_region
          _
        $region20: #{tpu_custom_call.1} parent=11 // pred_fallthru
          _
      $region12: #{tpu_custom_call.1} parent=5 // pred_fallthru
        _
      %p146 = scmp.lt.s32.totalorder %s15, 2
      // Predicated region
      $region21: #{tpu_custom_call.1} parent=5 // pred_check
        %p147 = pneg %p146
      $region22: #{tpu_custom_call.1} parent=5 // pred_check_branch
        %149 = sbr.rel (%p147) target = $region24
      $region23: #{tpu_custom_call.1} parent=5 // pred_region
        // Predicated region
        $region25: #{tpu_custom_call.1} parent=23 // pred_check
          %p150 = pneg %p49
        $region26: #{tpu_custom_call.1} parent=23 // pred_check_branch
          %152 = sbr.rel (%p150) target = $region28
        $region27: #{tpu_custom_call.1} parent=23 // pred_region
          %s153 = sand.u32 %s39, 1
          %s154 = scalar_lea.sflag [#allocation3], %s153
          %s155 = sand.u32 %s39, 1
          %s156 = smul.addr %s155, 32
          %s157 = scalar_lea.vmem [#allocation2], %s156
          %s159 = ssub.s32 512, 512
          %160 = vsyncadd %s154, %s159
          %s161 = smul.addr %s22, 4
          %s162 = sadd.s32 %s23, %s161
          %s163 = smul.addr %s162, 128
          %s164 = scalar_lea.hbm %s0, %s163
          %s165 = sshll.u32 %s157, 4
          %s166 = int_to_ptr.vmem [resolvable:$true] %s165
          %171 = dma.hbm_to_vmem [thread:$0]  %s164, 512, %s166, %s154, 128, 128, 8
        $region28: #{tpu_custom_call.1} parent=23 // pred_fallthru
          _
      $region24: #{tpu_custom_call.1} parent=5 // pred_fallthru
        _
      %p172 = scmp.le.s32.totalorder 1, %s15
      %p173 = scmp.lt.s32.totalorder %s15, 3
      %p174 = pnand %p172, %p173
      %p175 = pneg %p174
      // Predicated region
      $region29: #{tpu_custom_call.1} parent=5 // pred_check
        _
      $region30: #{tpu_custom_call.1} parent=5 // pred_check_branch
        %177 = sbr.rel (%p174) target = $region32
      $region31: #{tpu_custom_call.1} parent=5 // pred_region
        %s178 = ssub.s32 %s15, 1
        %s179 = sand.u32 %s42, 1
        %s180 = scalar_lea.sflag [#allocation3], %s179
        %s181 = sand.u32 %s42, 1
        %s182 = smul.addr %s181, 32
        %s183 = scalar_lea.vmem [#allocation2], %s182
        // Predicated region
        $region33: #{tpu_custom_call.1} parent=31 // pred_check
          %p184 = pneg %p55
        $region34: #{tpu_custom_call.1} parent=31 // pred_check_branch
          %186 = sbr.rel (%p184) target = $region36
        $region35: #{tpu_custom_call.1} parent=31 // pred_region
          %187 = dma.done %s180, 512
        $region36: #{tpu_custom_call.1} parent=31 // pred_fallthru
          _
        %s188 = sand.u32 %s42, 1
        %s189 = scalar_lea.sflag [#allocation3], %s188
        %s190 = sand.u32 %s42, 1
        %s191 = smul.addr %s190, 32
        %s192 = scalar_lea.vmem [#allocation2], %s191
        %p193 = pneg %p55
        %p194 = pneg %p52
        %p195 = pneg %p76
        %p196 = pneg %p73
        %p197 = pneg %p97
        %p198 = pneg %p94
        %p199 = pneg %p125
        %p200 = pneg %p122
        %s201 = sand.u32 %s112, 1
        %s202 = scalar_lea.sflag [#allocation4], %s201
        %s203 = sand.u32 %s112, 1
        %s204 = smul.addr %s203, 32
        %s205 = scalar_lea.vmem [#allocation5], %s204
        %v206 = vld [vmem:[%s1] sm:$0xff]
        %v207 = vld [vmem:[%s1 + $0x8] sm:$0xff]
        %v208 = vld [vmem:[%s1 + $0x10] sm:$0xff]
        %v209 = vld [vmem:[%s1 + $0x18] sm:$0xff]
        %v210 = vld [vmem:[%s2] sm:$0xff]
        %v211 = vld [vmem:[%s2 + $0x8] sm:$0xff]
        %v212 = vld [vmem:[%s2 + $0x10] sm:$0xff]
        %v213 = vld [vmem:[%s2 + $0x18] sm:$0xff]
        %v214 = vmul.f32 %v206, %v206
        %v215 = vmul.f32 %v207, %v207
        %v216 = vmul.f32 %v208, %v208
        %v217 = vmul.f32 %v209, %v209
        %vm218 = vcmask 261120
        %v219 = vsel %vm218, %v214, 0.0
        %220 = vadd.xlane.f32.xlu0 %v219
        %v221 = vpop.xlane.xlu0 %220
        %v222 = vsel %vm218, %v215, 0.0
        %223 = vadd.xlane.f32.xlu0 %v222
        %v224 = vpop.xlane.xlu0 %223
        %v225 = vsel %vm218, %v216, 0.0
        %226 = vadd.xlane.f32.xlu0 %v225
        %v227 = vpop.xlane.xlu0 %226
        %v228 = vsel %vm218, %v217, 0.0
        %229 = vadd.xlane.f32.xlu0 %v228
        %v230 = vpop.xlane.xlu0 %229
        %v231 = vrsqrt.pop %v221
        %v232 = vrsqrt.pop %v224
        %v233 = vrsqrt.pop %v227
        %v234 = vrsqrt.pop %v230
        %v235 = vmul.f32 %v210, %v231
        %v236 = vmul.f32 %v211, %v232
        %v237 = vmul.f32 %v212, %v233
        %v238 = vmul.f32 %v213, %v234
        %240 = vset.pattern.permute.xlu0 0
        %241 = vperm.xlu0 %240, %v235
        %v242 = vpop.permute.xlu0 %241
        %245 = vset.pattern.permute.xlu0 0
        %246 = vperm.xlu0 %245, %v236
        %v247 = vpop.permute.xlu0 %246
        %250 = vset.pattern.permute.xlu0 0
        %251 = vperm.xlu0 %250, %v237
        %v252 = vpop.permute.xlu0 %251
        %255 = vset.pattern.permute.xlu0 0
        %256 = vperm.xlu0 %255, %v238
        %v257 = vpop.permute.xlu0 %256
        %v259 = vmul.f32 %v206, %v242
        %v260 = vmul.f32 %v207, %v247
        %v261 = vmul.f32 %v208, %v252
        %v262 = vmul.f32 %v209, %v257
        %v263 = vld [vmem:[%s183] sm:$0xff]
        %v264 = vld [vmem:[%s183 + $0x8] sm:$0xff]
        %v265 = vld [vmem:[%s183 + $0x10] sm:$0xff]
        %v266 = vld [vmem:[%s183 + $0x18] sm:$0xff]
        %268 = vset.pattern.permute.xlu0 1
        %269 = vperm.xlu0 %268, %v210
        %v270 = vpop.permute.xlu0 %269
        %273 = vset.pattern.permute.xlu0 1
        %274 = vperm.xlu0 %273, %v211
        %v275 = vpop.permute.xlu0 %274
        %278 = vset.pattern.permute.xlu0 1
        %279 = vperm.xlu0 %278, %v212
        %v280 = vpop.permute.xlu0 %279
        %283 = vset.pattern.permute.xlu0 1
        %284 = vperm.xlu0 %283, %v213
        %v285 = vpop.permute.xlu0 %284
        %v288 = vsel %vm218, %v259, 0
        %v291 = vsel %vm218, %v260, 0
        %v294 = vsel %vm218, %v261, 0
        %v297 = vsel %vm218, %v262, 0
        %299 = vmatprep.subr.mxu0 0.0
        %300 = vmatpush1.msra.mxu0 0.0
        %301 = vmatprep.subr.mxu0 0.0
        %302 = vmatpush1.msra.mxu0 0.0
        %303 = vmatprep.subr.mxu0 0.0
        %304 = vmatpush1.msra.mxu0 0.0
        %305 = vmatprep.subr.mxu0 0.0
        %306 = vmatpush1.msra.mxu0 0.0
        %307 = vmatprep.subr.mxu0 0.0
        %308 = vmatpush1.msra.mxu0 0.0
        %309 = vmatprep.subr.mxu0 0.0
        %310 = vmatpush1.msra.mxu0 0.0
        %311 = vmatprep.subr.mxu0 0.0
        %312 = vmatpush1.msra.mxu0 0.0
        %313 = vmatprep.subr.mxu0 0.0
        %314 = vmatpush1.msra.mxu0 0.0
        %315 = vmatprep.subr.mxu0 0.0
        %316 = vmatpush1.msra.mxu0 0.0
        %317 = vmatprep.subr.mxu0 0.0
        %318 = vmatpush1.msra.mxu0 0.0
        %319 = vmatprep.subr.mxu0 0.0
        %320 = vmatpush1.msra.mxu0 0.0
        %321 = vmatprep.subr.mxu0 0.0
        %322 = vmatpush1.msra.mxu0 0.0
        %323 = vmatprep.subr.mxu0 0.0
        %324 = vmatpush1.msra.mxu0 %v266
        %325 = vmatprep.subr.mxu0 0.0
        %326 = vmatpush1.msra.mxu0 %v265
        %327 = vmatprep.subr.mxu0 0.0
        %328 = vmatpush1.msra.mxu0 %v264
        %329 = vmatprep.subr.mxu0 0.0
        %330 = vmatpush1.msra.mxu0 %v263
        %331 = vmatprep.subr.mxu0 0.0
        %332 = vmatpush2.msra.mxu0 0.0
        %333 = vmatprep.subr.mxu0 0.0
        %334 = vmatpush2.msra.mxu0 0.0
        %335 = vmatprep.subr.mxu0 0.0
        %336 = vmatpush2.msra.mxu0 0.0
        %337 = vmatprep.subr.mxu0 0.0
        %338 = vmatpush2.msra.mxu0 0.0
        %339 = vmatprep.subr.mxu0 0.0
        %340 = vmatpush2.msra.mxu0 0.0
        %341 = vmatprep.subr.mxu0 0.0
        %342 = vmatpush2.msra.mxu0 0.0
        %343 = vmatprep.subr.mxu0 0.0
        %344 = vmatpush2.msra.mxu0 0.0
        %345 = vmatprep.subr.mxu0 0.0
        %346 = vmatpush2.msra.mxu0 0.0
        %347 = vmatprep.subr.mxu0 0.0
        %348 = vmatpush2.msra.mxu0 0.0
        %349 = vmatprep.subr.mxu0 0.0
        %350 = vmatpush2.msra.mxu0 0.0
        %351 = vmatprep.subr.mxu0 0.0
        %352 = vmatpush2.msra.mxu0 0.0
        %353 = vmatprep.subr.mxu0 0.0
        %354 = vmatpush2.msra.mxu0 0.0
        %355 = vmatprep.subr.mxu0 0.0
        %356 = vmatpush2.msra.mxu0 0.0
        %357 = vmatprep.subr.mxu0 0.0
        %358 = vmatpush2.msra.mxu0 0.0
        %359 = vmatprep.subr.mxu0 0.0
        %360 = vmatpush2.msra.mxu0 0.0
        %361 = vmatprep.subr.mxu0 0.0
        %362 = vmatpush2.msra.mxu0 0.0
        %363 = vmatprep.mubr.f32.mxu0 0.0
        %364 = vmatmul.mubr.f32.gmra.mxu0 %v288
        %v365 = vpop.f32.mrf.mxu0
        %v366 = vadd.f32 %v270, %v365
        %v367 = vpop.f32.mrf.mxu0
        %368 = vmatprep.mubr.f32.mxu0 0.0
        %369 = vmatmul.mubr.f32.gmra.mxu0 %v291
        %v370 = vpop.f32.mrf.mxu0
        %v371 = vadd.f32 %v275, %v370
        %v372 = vpop.f32.mrf.mxu0
        %373 = vmatprep.mubr.f32.mxu0 0.0
        %374 = vmatmul.mubr.f32.gmra.mxu0 %v294
        %v375 = vpop.f32.mrf.mxu0
        %v376 = vadd.f32 %v280, %v375
        %v377 = vpop.f32.mrf.mxu0
        %378 = vmatprep.mubr.f32.mxu0 0.0
        %379 = vmatmul.mubr.f32.gmra.mxu0 %v297
        %v380 = vpop.f32.mrf.mxu0
        %v381 = vadd.f32 %v285, %v380
        %v382 = vpop.f32.mrf.mxu0
        %383 = vdwg.mxu0
        %v384 = vmax.f32 %v366, 0.0
        %v385 = vmax.f32 %v371, 0.0
        %v386 = vmax.f32 %v376, 0.0
        %v387 = vmax.f32 %v381, 0.0
        %vm388 = vcmask 523264
        %389 = vst.msk [vmem:[%s205] sm:$0xff] %vm388, %v384
        %390 = vst.msk [vmem:[%s205 + $0x8] sm:$0xff] %vm388, %v385
        %391 = vst.msk [vmem:[%s205 + $0x10] sm:$0xff] %vm388, %v386
        %392 = vst.msk [vmem:[%s205 + $0x18] sm:$0xff] %vm388, %v387
        %s393 = sand.u32 %s112, 1
        %s394 = scalar_lea.sflag [#allocation4], %s393
        %s395 = sand.u32 %s112, 1
        %s396 = smul.addr %s395, 32
        %s397 = scalar_lea.vmem [#allocation5], %s396
        // Predicated region
        $region37: #{tpu_custom_call.1} parent=31 // pred_check
          %p398 = pneg %p122
        $region38: #{tpu_custom_call.1} parent=31 // pred_check_branch
          %400 = sbr.rel (%p398) target = $region40
        $region39: #{tpu_custom_call.1} parent=31 // pred_region
          %s402 = ssub.s32 512, 512
          %403 = vsyncadd %s394, %s402
          %s404 = smul.addr %s24, 4
          %s405 = sadd.s32 %s25, %s404
          %s406 = smul.addr %s405, 128
          %s407 = scalar_lea.hbm %s3, %s406
          %s408 = sshll.u32 %s397, 4
          %s409 = int_to_ptr.vmem [resolvable:$true] %s408
          %414 = dma.vmem_to_hbm [thread:$0]  %s409, 512, %s407, %s394, 128, 128, 8
        $region40: #{tpu_custom_call.1} parent=31 // pred_fallthru
          _
      $region32: #{tpu_custom_call.1} parent=5 // pred_fallthru
        _
      %p415 = scmp.le.s32.totalorder 2, %s15
      // Predicated region
      $region41: #{tpu_custom_call.1} parent=5 // pred_check
        %p416 = pneg %p415
      $region42: #{tpu_custom_call.1} parent=5 // pred_check_branch
        %418 = sbr.rel (%p416) target = $region44
      $region43: #{tpu_custom_call.1} parent=5 // pred_region
        %s419 = ssub.s32 %s15, 2
        // Predicated region
        $region45: #{tpu_custom_call.1} parent=43 // pred_check
          %p420 = pneg %p128
        $region46: #{tpu_custom_call.1} parent=43 // pred_check_branch
          %422 = sbr.rel (%p420) target = $region48
        $region47: #{tpu_custom_call.1} parent=43 // pred_region
          %s423 = sand.u32 %s113, 1
          %s424 = scalar_lea.sflag [#allocation4], %s423
          %s425 = sand.u32 %s113, 1
          %s426 = smul.addr %s425, 32
          %s427 = scalar_lea.vmem [#allocation5], %s426
          %428 = dma.done %s424, 512
        $region48: #{tpu_custom_call.1} parent=43 // pred_fallthru
          _
      $region44: #{tpu_custom_call.1} parent=5 // pred_fallthru
        _
    $region6: #{tpu_custom_call.1} parent=1 // loop_footer
      %s19 = sadd.s32 1, %s15
    $region7: #{tpu_custom_call.1} parent=1 // loop_footer_branch
      %14 = sbr.rel target = $region3
    $region8: #{tpu_custom_call.1} parent=1 // loop_exit
      _
    %429 = vsyncpa [#allocation3], 1
    %s430 = scalar_lea.sflag [#allocation3], 1
    %431 = vsyncpa %s430, 1
    %432 = vsyncpa [#allocation4], 1
    %s433 = scalar_lea.sflag [#allocation4], 1
    %434 = vsyncpa %s433, 1

</llo_original>
